<compile_context>
chip_gen: v5e
topology: v5e:2x2
jax: 0.10.0
libtpu: 0.0.40
codegen_flags: <defaults>
</compile_context>

<pallas_src>
import math
import functools

import jax
import jax.numpy as jnp
from jax.experimental import pallas as pl
from jax.experimental.pallas import tpu as pltpu


def _global_attention_kernel(
    x_ref,                 # (rows, E)   f32   rows = block_batch * S
    wqkv_ref,              # (E, 3E)     bf16  q-columns pre-scaled by 1/sqrt(Dh)
    bqkv_ref,              # (1, 3E)     f32   q-part pre-scaled
    wo_ref,                # (E, E)      bf16  out_proj weight (x @ W layout)
    bo_ref,                # (1, E)      f32
    gamma_ref, beta_ref,   # (1, E)      f32   LayerNorm affine
    wl_ref,                # (E, E)      bf16  final Linear weight (x @ W layout)
    bl_ref,                # (1, E)      f32
    o_ref,                 # (rows, E)
    qkv_ref,               # (rows, 3E)  bf16  VMEM scratch (parked QKV projection)
    heads_ref,             # (rows, E)   bf16  VMEM scratch (concat of head outputs)
    *, num_heads, head_dim, block_batch, seq_len,
):
    E = num_heads * head_dim
    S = seq_len

    # ---- fused QKV projection: single bf16 MXU matmul, f32 accumulation ----
    # Immediately park the result in bf16 scratch so the f32 (rows, 3E) slab
    # does not stay live across the head loops.
    qkv = jnp.dot(x_ref[...].astype(jnp.bfloat16), wqkv_ref[...],
                  preferred_element_type=jnp.float32) + bqkv_ref[...]
    qkv_ref[...] = qkv.astype(jnp.bfloat16)

    # ---- per-(batch, head) attention ----
    # block_batch / num_heads are small static ints, so these loops are unrolled
    # with static sublane/lane offsets; each iteration only reads/writes scratch
    # refs, so no (S, S) intermediate is carried across iterations.
    for b in range(block_batch):
        r0 = b * S
        for h in range(num_heads):
            lo = h * head_dim
            qh = qkv_ref[r0:r0 + S, 0 * E + lo:0 * E + lo + head_dim]  # (S, Dh) bf16
            kh = qkv_ref[r0:r0 + S, 1 * E + lo:1 * E + lo + head_dim]
            vh = qkv_ref[r0:r0 + S, 2 * E + lo:2 * E + lo + head_dim]
            # QK^T without materializing kh.T: contract the Dh axis of both.
            s = jax.lax.dot_general(qh, kh, (((1,), (1,)), ((), ())),
                                    preferred_element_type=jnp.float32)  # (S, S) f32
            m = jnp.max(s, axis=-1, keepdims=True)
            p = jnp.exp((s - m).astype(jnp.bfloat16))                    # bf16 exp (EUP)
            l = jnp.sum(p.astype(jnp.float32), axis=-1, keepdims=True)   # f32 row-sum
            ho = jnp.dot(p, vh, preferred_element_type=jnp.float32)      # (S, Dh) f32
            # Normalize after the PV matmul: O(S*Dh) instead of O(S^2).
            ho = ho * pl.reciprocal(l, approx=True)
            heads_ref[r0:r0 + S, lo:lo + head_dim] = ho.astype(jnp.bfloat16)

    # ---- single out-projection with K = E (fills the MXU) + bias ----
    attn = jnp.dot(heads_ref[...], wo_ref[...],
                   preferred_element_type=jnp.float32) + bo_ref[...]     # (rows, E)

    # ---- residual + LayerNorm (f32 statistics, eps = 1e-5) ----
    y = attn + x_ref[...].astype(jnp.float32)
    mean = jnp.mean(y, axis=-1, keepdims=True)
    cent = y - mean
    var = jnp.mean(cent * cent, axis=-1, keepdims=True)
    ynorm = cent * jax.lax.rsqrt(var + 1e-5) * gamma_ref[...] + beta_ref[...]

    # ---- final Linear + ReLU, lane-dense 2D store ----
    z = jnp.dot(ynorm.astype(jnp.bfloat16), wl_ref[...],
                preferred_element_type=jnp.float32) + bl_ref[...]
    o_ref[...] = jnp.maximum(z, 0.0).astype(o_ref.dtype)


def global_attention_pallas(x, params, *, num_heads, block_batch=None):
    (wq, wk, wv, bq, bk, bv, wo, bo, gamma, beta, wl, bl) = params
    B, S, E = x.shape
    assert E % num_heads == 0
    head_dim = E // num_heads
    scale = 1.0 / math.sqrt(head_dim)

    if block_batch is None:
        # >= 2 grid steps by default so a v7x megacore can shard the batch axis
        # across both TensorCores; on v5e/v6e tune upward to fill VMEM / MXU M.
        block_batch = max(1, B // 2)
    assert B % block_batch == 0
    rows = block_batch * S
    assert rows % 8 == 0 or rows == B * S, "row block must be sublane(8)-aligned"
    grid = (B // block_batch,)

    # Fuse QKV into one (E, 3E) weight / (1, 3E) bias, folding 1/sqrt(Dh) into the
    # q columns at trace time. Weights bf16 (MXU); biases / LN affine stay f32.
    w_qkv = jnp.concatenate([wq * scale, wk, wv], axis=1).astype(jnp.bfloat16)
    b_qkv = jnp.concatenate([bq * scale, bk, bv], axis=1).astype(jnp.float32)
    wo_b = wo.astype(jnp.bfloat16)
    wl_b = wl.astype(jnp.bfloat16)

    # Flatten (B, S, E) -> (B*S, E) outside the kernel (free, row-major) so the
    # kernel blocks are plain lane-dense 2D tiles with no in-kernel reshape.
    x2 = x.reshape(B * S, E)

    kernel = functools.partial(
        _global_attention_kernel,
        num_heads=num_heads, head_dim=head_dim,
        block_batch=block_batch, seq_len=S,
    )

    # VMEM budget: ~75% of this chip's capacity (v5e/v6e ~96 MiB of 128 MiB,
    # v7x ~48 MiB of 64 MiB) instead of a hard-coded constant.
    try:
        info = pltpu.get_tpu_info()
        vmem_cap = int(getattr(info, "vmem_capacity_bytes", 128 * 1024 * 1024))
    except Exception:  # pragma: no cover - defensive fallback
        vmem_cap = 128 * 1024 * 1024
    vmem_limit = (vmem_cap * 3) // 4

    # Grid-invariant operands: whole-array resident in VMEM (no per-step blocking
    # or double-buffered weight DMA).
    resident = pl.BlockSpec(memory_space=pltpu.MemorySpace.VMEM)

    out2 = pl.pallas_call(
        kernel,
        out_shape=jax.ShapeDtypeStruct((B * S, E), x.dtype),
        grid_spec=pltpu.PrefetchScalarGridSpec(
            num_scalar_prefetch=0,
            grid=grid,
            in_specs=[
                pl.BlockSpec((rows, E), lambda b: (b, 0)),   # x (flattened)
                resident, resident,                          # w_qkv, b_qkv
                resident, resident,                          # wo, bo
                resident, resident,                          # gamma, beta
                resident, resident,                          # wl, bl
            ],
            out_specs=pl.BlockSpec((rows, E), lambda b: (b, 0)),
            scratch_shapes=[
                pltpu.VMEM((rows, 3 * E), jnp.bfloat16),     # parked bf16 QKV
                pltpu.VMEM((rows, E), jnp.bfloat16),         # per-head outputs
            ],
        ),
        compiler_params=pltpu.CompilerParams(
            dimension_semantics=("parallel",),
            vmem_limit_bytes=vmem_limit,
        ),
    )(x2, w_qkv, b_qkv, wo_b, bo, gamma, beta, wl_b, bl)
    return out2.reshape(B, S, E)


def make_params(key, hidden_size):
    """Deterministic synthetic params (shapes match the PyTorch module)."""
    E = hidden_size
    ks = jax.random.split(key, 8)
    s = 1.0 / math.sqrt(E)
    # nn.MultiheadAttention: in_proj_weight (3E, E), in_proj_bias (3E,)
    in_proj_w = jax.random.uniform(ks[0], (3 * E, E), jnp.float32, -s, s)
    in_proj_b = jax.random.uniform(ks[1], (3 * E,), jnp.float32, -s, s)
    wq_t = in_proj_w[0 * E:1 * E].T        # transposed for x @ W
    wk_t = in_proj_w[1 * E:2 * E].T
    wv_t = in_proj_w[2 * E:3 * E].T
    bq = in_proj_b[0 * E:1 * E].reshape(1, E)
    bk = in_proj_b[1 * E:2 * E].reshape(1, E)
    bv = in_proj_b[2 * E:3 * E].reshape(1, E)
    # out_proj: Linear(E, E)
    wo_t = jax.random.uniform(ks[2], (E, E), jnp.float32, -s, s).T
    bo = jax.random.uniform(ks[3], (E,), jnp.float32, -s, s).reshape(1, E)
    # LayerNorm(E): default weight=1, bias=0
    gamma = jnp.ones((1, E), jnp.float32)
    beta = jnp.zeros((1, E), jnp.float32)
    # final Linear(E, E)
    wl_t = jax.random.uniform(ks[4], (E, E), jnp.float32, -s, s).T
    bl = jax.random.uniform(ks[5], (E,), jnp.float32, -s, s).reshape(1, E)
    return (wq_t, wk_t, wv_t, bq, bk, bv, wo_t, bo, gamma, beta, wl_t, bl)


def global_attention_ref(x, params, *, num_heads):
    """Pure-JAX f32 reference mirroring torch.nn.MultiheadAttention forward."""
    (wq, wk, wv, bq, bk, bv, wo, bo, gamma, beta, wl, bl) = params
    B, S, E = x.shape
    Dh = E // num_heads
    q = x @ wq + bq
    k = x @ wk + bk
    v = x @ wv + bv
    q = q.reshape(B, S, num_heads, Dh).transpose(0, 2, 1, 3) / math.sqrt(Dh)
    k = k.reshape(B, S, num_heads, Dh).transpose(0, 2, 1, 3)
    v = v.reshape(B, S, num_heads, Dh).transpose(0, 2, 1, 3)
    s = jnp.einsum("bhqd,bhkd->bhqk", q, k)
    p = jax.nn.softmax(s, axis=-1)
    a = jnp.einsum("bhqk,bhkd->bhqd", p, v).transpose(0, 2, 1, 3).reshape(B, S, E)
    a = a @ wo + bo
    y = a + x
    mu = jnp.mean(y, -1, keepdims=True)
    var = jnp.mean((y - mu) ** 2, -1, keepdims=True)
    yn = (y - mu) / jnp.sqrt(var + 1e-5) * gamma + beta
    return jax.nn.relu(yn @ wl + bl)


if __name__ == "__main__":
    B, S, E, H = 2, 8, 32, 4
    key = jax.random.PRNGKey(0)
    kx, kp = jax.random.split(key)
    x = jax.random.normal(kx, (B, S, E), jnp.float32)
    params = make_params(kp, E)

    out = global_attention_pallas(x, params, num_heads=H)
    out = jax.block_until_ready(out)

    ref = global_attention_ref(x, params, num_heads=H)
    assert out.shape == (B, S, E)
    # bf16 MXU operands, bf16 exp and approx softmax reciprocal -> looser tolerance.
    assert jnp.allclose(out, ref, rtol=5e-2, atol=5e-2), "mismatch vs JAX reference"

    print("KERNEL_OK")
</pallas_src>

<mosaic_0001>
module attributes {stable_mosaic.version = 11 : i64} {
  func.func @_global_attention_kernel(%arg0: i32, %arg1: memref<8x32xf32, #tpu.memory_space<vmem>>, %arg2: memref<32x96xbf16, #tpu.memory_space<vmem>>, %arg3: memref<1x96xf32, #tpu.memory_space<vmem>>, %arg4: memref<32x32xbf16, #tpu.memory_space<vmem>>, %arg5: memref<1x32xf32, #tpu.memory_space<vmem>>, %arg6: memref<1x32xf32, #tpu.memory_space<vmem>>, %arg7: memref<1x32xf32, #tpu.memory_space<vmem>>, %arg8: memref<32x32xbf16, #tpu.memory_space<vmem>>, %arg9: memref<1x32xf32, #tpu.memory_space<vmem>>, %arg10: memref<8x32xf32, #tpu.memory_space<vmem>>, %arg11: memref<8x96xbf16, #tpu.memory_space<vmem>>, %arg12: memref<8x32xbf16, #tpu.memory_space<vmem>>) attributes {dimension_semantics = [#tpu.dimension_semantics<parallel>], iteration_bounds = array<i64: 2>, scalar_prefetch = 0 : i64, scratch_operands = 2 : i64, tpu.core_type = #tpu.core_type<tc>, window_params = [{transform_indices = @transform_0, window_bounds = array<i64: 8, 32>}, {pipeline_mode = #tpu.pipeline_mode<synchronous>, transform_indices = @transform_1, window_bounds = array<i64: 32, 96>}, {pipeline_mode = #tpu.pipeline_mode<synchronous>, transform_indices = @transform_2, window_bounds = array<i64: 1, 96>}, {pipeline_mode = #tpu.pipeline_mode<synchronous>, transform_indices = @transform_3, window_bounds = array<i64: 32, 32>}, {pipeline_mode = #tpu.pipeline_mode<synchronous>, transform_indices = @transform_4, window_bounds = array<i64: 1, 32>}, {pipeline_mode = #tpu.pipeline_mode<synchronous>, transform_indices = @transform_5, window_bounds = array<i64: 1, 32>}, {pipeline_mode = #tpu.pipeline_mode<synchronous>, transform_indices = @transform_6, window_bounds = array<i64: 1, 32>}, {pipeline_mode = #tpu.pipeline_mode<synchronous>, transform_indices = @transform_7, window_bounds = array<i64: 32, 32>}, {pipeline_mode = #tpu.pipeline_mode<synchronous>, transform_indices = @transform_8, window_bounds = array<i64: 1, 32>}, {transform_indices = @transform_9, window_bounds = array<i64: 8, 32>}]} {
    %c0 = arith.constant 0 : index
    %c0_0 = arith.constant 0 : index
    %0 = vector.load %arg1[%c0, %c0_0] : memref<8x32xf32, #tpu.memory_space<vmem>>, vector<8x32xf32>
    %1 = arith.truncf %0 : vector<8x32xf32> to vector<8x32xbf16>
    %c0_1 = arith.constant 0 : index
    %c0_2 = arith.constant 0 : index
    %2 = vector.load %arg2[%c0_1, %c0_2] : memref<32x96xbf16, #tpu.memory_space<vmem>>, vector<32x96xbf16>
    %cst = arith.constant dense<0.000000e+00> : vector<8x96xf32>
    %3 = tpu.matmul %1, %2, %cst {dimension_numbers = #tpu.dot_dimension_numbers<[1], [0], [0], [1], [0, 0, 1, 1], [], []>} : vector<8x32xbf16>, vector<32x96xbf16>, vector<8x96xf32> -> vector<8x96xf32>
    %c0_3 = arith.constant 0 : index
    %c0_4 = arith.constant 0 : index
    %4 = vector.load %arg3[%c0_3, %c0_4] : memref<1x96xf32, #tpu.memory_space<vmem>>, vector<1x96xf32>
    %5 = vector.broadcast %4 : vector<1x96xf32> to vector<8x96xf32>
    %6 = arith.addf %3, %5 : vector<8x96xf32>
    %7 = arith.truncf %6 : vector<8x96xf32> to vector<8x96xbf16>
    %c0_5 = arith.constant 0 : index
    %c0_6 = arith.constant 0 : index
    %8 = vector.load %arg11[%c0_5, %c0_6] : memref<8x96xbf16, #tpu.memory_space<vmem>>, vector<8x96xbf16>
    tpu.vector_store %arg11[%c0_5, %c0_6], %7 {strides = array<i32>} : memref<8x96xbf16, #tpu.memory_space<vmem>>, vector<8x96xbf16>,
    %c0_7 = arith.constant 0 : index
    %c0_8 = arith.constant 0 : index
    %9 = vector.load %arg11[%c0_7, %c0_8] : memref<8x96xbf16, #tpu.memory_space<vmem>>, vector<8x8xbf16>
    %c0_9 = arith.constant 0 : index
    %c32 = arith.constant 32 : index
    %10 = vector.load %arg11[%c0_9, %c32] : memref<8x96xbf16, #tpu.memory_space<vmem>>, vector<8x8xbf16>
    %c0_10 = arith.constant 0 : index
    %c64 = arith.constant 64 : index
    %11 = vector.load %arg11[%c0_10, %c64] : memref<8x96xbf16, #tpu.memory_space<vmem>>, vector<8x8xbf16>
    %cst_11 = arith.constant dense<0.000000e+00> : vector<8x8xf32>
    %12 = tpu.matmul %9, %10, %cst_11 {dimension_numbers = #tpu.dot_dimension_numbers<[1], [1], [0], [0], [0, 0, 1, 0], [], []>} : vector<8x8xbf16>, vector<8x8xbf16>, vector<8x8xf32> -> vector<8x8xf32>
    %cst_12 = arith.constant dense<0xFF800000> : vector<8xf32>
    %13 = vector.multi_reduction <maximumf>, %12, %cst_12 [1] : vector<8x8xf32> to vector<8xf32>
    %14 = vector.shape_cast %13 : vector<8xf32> to vector<8x1xf32>
    %15 = vector.broadcast %14 : vector<8x1xf32> to vector<8x8xf32>
    %16 = arith.subf %12, %15 : vector<8x8xf32>
    %17 = arith.truncf %16 : vector<8x8xf32> to vector<8x8xbf16>
    %18 = math.exp %17 : vector<8x8xbf16>
    %19 = arith.extf %18 : vector<8x8xbf16> to vector<8x8xf32>
    %cst_13 = arith.constant dense<0.000000e+00> : vector<8xf32>
    %20 = vector.multi_reduction <add>, %19, %cst_13 [1] : vector<8x8xf32> to vector<8xf32>
    %21 = vector.shape_cast %20 : vector<8xf32> to vector<8x1xf32>
    %cst_14 = arith.constant dense<0.000000e+00> : vector<8x8xf32>
    %22 = tpu.matmul %18, %11, %cst_14 {dimension_numbers = #tpu.dot_dimension_numbers<[1], [0], [0], [1], [0, 0, 1, 1], [], []>} : vector<8x8xbf16>, vector<8x8xbf16>, vector<8x8xf32> -> vector<8x8xf32>
    %23 = tpu.reciprocal %21 {approx = true} : vector<8x1xf32> -> vector<8x1xf32>
    %24 = vector.broadcast %23 : vector<8x1xf32> to vector<8x8xf32>
    %25 = arith.mulf %22, %24 : vector<8x8xf32>
    %26 = arith.truncf %25 : vector<8x8xf32> to vector<8x8xbf16>
    %c0_15 = arith.constant 0 : index
    %c0_16 = arith.constant 0 : index
    %27 = vector.load %arg12[%c0_15, %c0_16] : memref<8x32xbf16, #tpu.memory_space<vmem>>, vector<8x8xbf16>
    tpu.vector_store %arg12[%c0_15, %c0_16], %26 {strides = array<i32>} : memref<8x32xbf16, #tpu.memory_space<vmem>>, vector<8x8xbf16>,
    %c0_17 = arith.constant 0 : index
    %c8 = arith.constant 8 : index
    %28 = vector.load %arg11[%c0_17, %c8] : memref<8x96xbf16, #tpu.memory_space<vmem>>, vector<8x8xbf16>
    %c0_18 = arith.constant 0 : index
    %c40 = arith.constant 40 : index
    %29 = vector.load %arg11[%c0_18, %c40] : memref<8x96xbf16, #tpu.memory_space<vmem>>, vector<8x8xbf16>
    %c0_19 = arith.constant 0 : index
    %c72 = arith.constant 72 : index
    %30 = vector.load %arg11[%c0_19, %c72] : memref<8x96xbf16, #tpu.memory_space<vmem>>, vector<8x8xbf16>
    %cst_20 = arith.constant dense<0.000000e+00> : vector<8x8xf32>
    %31 = tpu.matmul %28, %29, %cst_20 {dimension_numbers = #tpu.dot_dimension_numbers<[1], [1], [0], [0], [0, 0, 1, 0], [], []>} : vector<8x8xbf16>, vector<8x8xbf16>, vector<8x8xf32> -> vector<8x8xf32>
    %cst_21 = arith.constant dense<0xFF800000> : vector<8xf32>
    %32 = vector.multi_reduction <maximumf>, %31, %cst_21 [1] : vector<8x8xf32> to vector<8xf32>
    %33 = vector.shape_cast %32 : vector<8xf32> to vector<8x1xf32>
    %34 = vector.broadcast %33 : vector<8x1xf32> to vector<8x8xf32>
    %35 = arith.subf %31, %34 : vector<8x8xf32>
    %36 = arith.truncf %35 : vector<8x8xf32> to vector<8x8xbf16>
    %37 = math.exp %36 : vector<8x8xbf16>
    %38 = arith.extf %37 : vector<8x8xbf16> to vector<8x8xf32>
    %cst_22 = arith.constant dense<0.000000e+00> : vector<8xf32>
    %39 = vector.multi_reduction <add>, %38, %cst_22 [1] : vector<8x8xf32> to vector<8xf32>
    %40 = vector.shape_cast %39 : vector<8xf32> to vector<8x1xf32>
    %cst_23 = arith.constant dense<0.000000e+00> : vector<8x8xf32>
    %41 = tpu.matmul %37, %30, %cst_23 {dimension_numbers = #tpu.dot_dimension_numbers<[1], [0], [0], [1], [0, 0, 1, 1], [], []>} : vector<8x8xbf16>, vector<8x8xbf16>, vector<8x8xf32> -> vector<8x8xf32>
    %42 = tpu.reciprocal %40 {approx = true} : vector<8x1xf32> -> vector<8x1xf32>
    %43 = vector.broadcast %42 : vector<8x1xf32> to vector<8x8xf32>
    %44 = arith.mulf %41, %43 : vector<8x8xf32>
    %45 = arith.truncf %44 : vector<8x8xf32> to vector<8x8xbf16>
    %c0_24 = arith.constant 0 : index
    %c8_25 = arith.constant 8 : index
    %46 = vector.load %arg12[%c0_24, %c8_25] : memref<8x32xbf16, #tpu.memory_space<vmem>>, vector<8x8xbf16>
    tpu.vector_store %arg12[%c0_24, %c8_25], %45 {strides = array<i32>} : memref<8x32xbf16, #tpu.memory_space<vmem>>, vector<8x8xbf16>,
    %c0_26 = arith.constant 0 : index
    %c16 = arith.constant 16 : index
    %47 = vector.load %arg11[%c0_26, %c16] : memref<8x96xbf16, #tpu.memory_space<vmem>>, vector<8x8xbf16>
    %c0_27 = arith.constant 0 : index
    %c48 = arith.constant 48 : index
    %48 = vector.load %arg11[%c0_27, %c48] : memref<8x96xbf16, #tpu.memory_space<vmem>>, vector<8x8xbf16>
    %c0_28 = arith.constant 0 : index
    %c80 = arith.constant 80 : index
    %49 = vector.load %arg11[%c0_28, %c80] : memref<8x96xbf16, #tpu.memory_space<vmem>>, vector<8x8xbf16>
    %cst_29 = arith.constant dense<0.000000e+00> : vector<8x8xf32>
    %50 = tpu.matmul %47, %48, %cst_29 {dimension_numbers = #tpu.dot_dimension_numbers<[1], [1], [0], [0], [0, 0, 1, 0], [], []>} : vector<8x8xbf16>, vector<8x8xbf16>, vector<8x8xf32> -> vector<8x8xf32>
    %cst_30 = arith.constant dense<0xFF800000> : vector<8xf32>
    %51 = vector.multi_reduction <maximumf>, %50, %cst_30 [1] : vector<8x8xf32> to vector<8xf32>
    %52 = vector.shape_cast %51 : vector<8xf32> to vector<8x1xf32>
    %53 = vector.broadcast %52 : vector<8x1xf32> to vector<8x8xf32>
    %54 = arith.subf %50, %53 : vector<8x8xf32>
    %55 = arith.truncf %54 : vector<8x8xf32> to vector<8x8xbf16>
    %56 = math.exp %55 : vector<8x8xbf16>
    %57 = arith.extf %56 : vector<8x8xbf16> to vector<8x8xf32>
    %cst_31 = arith.constant dense<0.000000e+00> : vector<8xf32>
    %58 = vector.multi_reduction <add>, %57, %cst_31 [1] : vector<8x8xf32> to vector<8xf32>
    %59 = vector.shape_cast %58 : vector<8xf32> to vector<8x1xf32>
    %cst_32 = arith.constant dense<0.000000e+00> : vector<8x8xf32>
    %60 = tpu.matmul %56, %49, %cst_32 {dimension_numbers = #tpu.dot_dimension_numbers<[1], [0], [0], [1], [0, 0, 1, 1], [], []>} : vector<8x8xbf16>, vector<8x8xbf16>, vector<8x8xf32> -> vector<8x8xf32>
    %61 = tpu.reciprocal %59 {approx = true} : vector<8x1xf32> -> vector<8x1xf32>
    %62 = vector.broadcast %61 : vector<8x1xf32> to vector<8x8xf32>
    %63 = arith.mulf %60, %62 : vector<8x8xf32>
    %64 = arith.truncf %63 : vector<8x8xf32> to vector<8x8xbf16>
    %c0_33 = arith.constant 0 : index
    %c16_34 = arith.constant 16 : index
    %65 = vector.load %arg12[%c0_33, %c16_34] : memref<8x32xbf16, #tpu.memory_space<vmem>>, vector<8x8xbf16>
    tpu.vector_store %arg12[%c0_33, %c16_34], %64 {strides = array<i32>} : memref<8x32xbf16, #tpu.memory_space<vmem>>, vector<8x8xbf16>,
    %c0_35 = arith.constant 0 : index
    %c24 = arith.constant 24 : index
    %66 = vector.load %arg11[%c0_35, %c24] : memref<8x96xbf16, #tpu.memory_space<vmem>>, vector<8x8xbf16>
    %c0_36 = arith.constant 0 : index
    %c56 = arith.constant 56 : index
    %67 = vector.load %arg11[%c0_36, %c56] : memref<8x96xbf16, #tpu.memory_space<vmem>>, vector<8x8xbf16>
    %c0_37 = arith.constant 0 : index
    %c88 = arith.constant 88 : index
    %68 = vector.load %arg11[%c0_37, %c88] : memref<8x96xbf16, #tpu.memory_space<vmem>>, vector<8x8xbf16>
    %cst_38 = arith.constant dense<0.000000e+00> : vector<8x8xf32>
    %69 = tpu.matmul %66, %67, %cst_38 {dimension_numbers = #tpu.dot_dimension_numbers<[1], [1], [0], [0], [0, 0, 1, 0], [], []>} : vector<8x8xbf16>, vector<8x8xbf16>, vector<8x8xf32> -> vector<8x8xf32>
    %cst_39 = arith.constant dense<0xFF800000> : vector<8xf32>
    %70 = vector.multi_reduction <maximumf>, %69, %cst_39 [1] : vector<8x8xf32> to vector<8xf32>
    %71 = vector.shape_cast %70 : vector<8xf32> to vector<8x1xf32>
    %72 = vector.broadcast %71 : vector<8x1xf32> to vector<8x8xf32>
    %73 = arith.subf %69, %72 : vector<8x8xf32>
    %74 = arith.truncf %73 : vector<8x8xf32> to vector<8x8xbf16>
    %75 = math.exp %74 : vector<8x8xbf16>
    %76 = arith.extf %75 : vector<8x8xbf16> to vector<8x8xf32>
    %cst_40 = arith.constant dense<0.000000e+00> : vector<8xf32>
    %77 = vector.multi_reduction <add>, %76, %cst_40 [1] : vector<8x8xf32> to vector<8xf32>
    %78 = vector.shape_cast %77 : vector<8xf32> to vector<8x1xf32>
    %cst_41 = arith.constant dense<0.000000e+00> : vector<8x8xf32>
    %79 = tpu.matmul %75, %68, %cst_41 {dimension_numbers = #tpu.dot_dimension_numbers<[1], [0], [0], [1], [0, 0, 1, 1], [], []>} : vector<8x8xbf16>, vector<8x8xbf16>, vector<8x8xf32> -> vector<8x8xf32>
    %80 = tpu.reciprocal %78 {approx = true} : vector<8x1xf32> -> vector<8x1xf32>
    %81 = vector.broadcast %80 : vector<8x1xf32> to vector<8x8xf32>
    %82 = arith.mulf %79, %81 : vector<8x8xf32>
    %83 = arith.truncf %82 : vector<8x8xf32> to vector<8x8xbf16>
    %c0_42 = arith.constant 0 : index
    %c24_43 = arith.constant 24 : index
    %84 = vector.load %arg12[%c0_42, %c24_43] : memref<8x32xbf16, #tpu.memory_space<vmem>>, vector<8x8xbf16>
    tpu.vector_store %arg12[%c0_42, %c24_43], %83 {strides = array<i32>} : memref<8x32xbf16, #tpu.memory_space<vmem>>, vector<8x8xbf16>,
    %c0_44 = arith.constant 0 : index
    %c0_45 = arith.constant 0 : index
    %85 = vector.load %arg12[%c0_44, %c0_45] : memref<8x32xbf16, #tpu.memory_space<vmem>>, vector<8x32xbf16>
    %c0_46 = arith.constant 0 : index
    %c0_47 = arith.constant 0 : index
    %86 = vector.load %arg4[%c0_46, %c0_47] : memref<32x32xbf16, #tpu.memory_space<vmem>>, vector<32x32xbf16>
    %cst_48 = arith.constant dense<0.000000e+00> : vector<8x32xf32>
    %87 = tpu.matmul %85, %86, %cst_48 {dimension_numbers = #tpu.dot_dimension_numbers<[1], [0], [0], [1], [0, 0, 1, 1], [], []>} : vector<8x32xbf16>, vector<32x32xbf16>, vector<8x32xf32> -> vector<8x32xf32>
    %c0_49 = arith.constant 0 : index
    %c0_50 = arith.constant 0 : index
    %88 = vector.load %arg5[%c0_49, %c0_50] : memref<1x32xf32, #tpu.memory_space<vmem>>, vector<1x32xf32>
    %89 = vector.broadcast %88 : vector<1x32xf32> to vector<8x32xf32>
    %90 = arith.addf %87, %89 : vector<8x32xf32>
    %c0_51 = arith.constant 0 : index
    %c0_52 = arith.constant 0 : index
    %91 = vector.load %arg1[%c0_51, %c0_52] : memref<8x32xf32, #tpu.memory_space<vmem>>, vector<8x32xf32>
    %92 = arith.addf %90, %91 : vector<8x32xf32>
    %cst_53 = arith.constant dense<0.000000e+00> : vector<8xf32>
    %93 = vector.multi_reduction <add>, %92, %cst_53 [1] : vector<8x32xf32> to vector<8xf32>
    %94 = vector.shape_cast %93 : vector<8xf32> to vector<8x1xf32>
    %cst_54 = arith.constant 3.200000e+01 : f32
    %95 = vector.broadcast %cst_54 : f32 to vector<8x1xf32>
    %96 = arith.divf %94, %95 : vector<8x1xf32>
    %97 = vector.broadcast %96 : vector<8x1xf32> to vector<8x32xf32>
    %98 = arith.subf %92, %97 : vector<8x32xf32>
    %99 = arith.mulf %98, %98 : vector<8x32xf32>
    %cst_55 = arith.constant dense<0.000000e+00> : vector<8xf32>
    %100 = vector.multi_reduction <add>, %99, %cst_55 [1] : vector<8x32xf32> to vector<8xf32>
    %101 = vector.shape_cast %100 : vector<8xf32> to vector<8x1xf32>
    %cst_56 = arith.constant 3.200000e+01 : f32
    %102 = vector.broadcast %cst_56 : f32 to vector<8x1xf32>
    %103 = arith.divf %101, %102 : vector<8x1xf32>
    %cst_57 = arith.constant 9.99999974E-6 : f32
    %104 = vector.broadcast %cst_57 : f32 to vector<8x1xf32>
    %105 = arith.addf %103, %104 : vector<8x1xf32>
    %106 = math.rsqrt %105 : vector<8x1xf32>
    %107 = vector.broadcast %106 : vector<8x1xf32> to vector<8x32xf32>
    %108 = arith.mulf %98, %107 : vector<8x32xf32>
    %c0_58 = arith.constant 0 : index
    %c0_59 = arith.constant 0 : index
    %109 = vector.load %arg6[%c0_58, %c0_59] : memref<1x32xf32, #tpu.memory_space<vmem>>, vector<1x32xf32>
    %110 = vector.broadcast %109 : vector<1x32xf32> to vector<8x32xf32>
    %111 = arith.mulf %108, %110 : vector<8x32xf32>
    %c0_60 = arith.constant 0 : index
    %c0_61 = arith.constant 0 : index
    %112 = vector.load %arg7[%c0_60, %c0_61] : memref<1x32xf32, #tpu.memory_space<vmem>>, vector<1x32xf32>
    %113 = vector.broadcast %112 : vector<1x32xf32> to vector<8x32xf32>
    %114 = arith.addf %111, %113 : vector<8x32xf32>
    %115 = arith.truncf %114 : vector<8x32xf32> to vector<8x32xbf16>
    %c0_62 = arith.constant 0 : index
    %c0_63 = arith.constant 0 : index
    %116 = vector.load %arg8[%c0_62, %c0_63] : memref<32x32xbf16, #tpu.memory_space<vmem>>, vector<32x32xbf16>
    %cst_64 = arith.constant dense<0.000000e+00> : vector<8x32xf32>
    %117 = tpu.matmul %115, %116, %cst_64 {dimension_numbers = #tpu.dot_dimension_numbers<[1], [0], [0], [1], [0, 0, 1, 1], [], []>} : vector<8x32xbf16>, vector<32x32xbf16>, vector<8x32xf32> -> vector<8x32xf32>
    %c0_65 = arith.constant 0 : index
    %c0_66 = arith.constant 0 : index
    %118 = vector.load %arg9[%c0_65, %c0_66] : memref<1x32xf32, #tpu.memory_space<vmem>>, vector<1x32xf32>
    %119 = vector.broadcast %118 : vector<1x32xf32> to vector<8x32xf32>
    %120 = arith.addf %117, %119 : vector<8x32xf32>
    %cst_67 = arith.constant 0.000000e+00 : f32
    %121 = vector.broadcast %cst_67 : f32 to vector<8x32xf32>
    %122 = arith.maximumf %120, %121 : vector<8x32xf32>
    %c0_68 = arith.constant 0 : index
    %c0_69 = arith.constant 0 : index
    %123 = vector.load %arg10[%c0_68, %c0_69] : memref<8x32xf32, #tpu.memory_space<vmem>>, vector<8x32xf32>
    tpu.vector_store %arg10[%c0_68, %c0_69], %122 {strides = array<i32>} : memref<8x32xf32, #tpu.memory_space<vmem>>, vector<8x32xf32>,
    return
  }
  func.func @transform_0(%arg0: i32) -> (i32, i32) {
    %c0_i32 = arith.constant 0 : i32
    %c0_i32_0 = arith.constant 0 : i32
    return %arg0, %c0_i32 : i32, i32
  }
  func.func @transform_1(%arg0: i32) -> (i32, i32) {
    %c0_i32 = arith.constant 0 : i32
    %c0_i32_0 = arith.constant 0 : i32
    %c0_i32_1 = arith.constant 0 : i32
    return %c0_i32, %c0_i32_0 : i32, i32
  }
  func.func @transform_2(%arg0: i32) -> (i32, i32) {
    %c0_i32 = arith.constant 0 : i32
    %c0_i32_0 = arith.constant 0 : i32
    %c0_i32_1 = arith.constant 0 : i32
    return %c0_i32, %c0_i32_0 : i32, i32
  }
  func.func @transform_3(%arg0: i32) -> (i32, i32) {
    %c0_i32 = arith.constant 0 : i32
    %c0_i32_0 = arith.constant 0 : i32
    %c0_i32_1 = arith.constant 0 : i32
    return %c0_i32, %c0_i32_0 : i32, i32
  }
  func.func @transform_4(%arg0: i32) -> (i32, i32) {
    %c0_i32 = arith.constant 0 : i32
    %c0_i32_0 = arith.constant 0 : i32
    %c0_i32_1 = arith.constant 0 : i32
    return %c0_i32, %c0_i32_0 : i32, i32
  }
  func.func @transform_5(%arg0: i32) -> (i32, i32) {
    %c0_i32 = arith.constant 0 : i32
    %c0_i32_0 = arith.constant 0 : i32
    %c0_i32_1 = arith.constant 0 : i32
    return %c0_i32, %c0_i32_0 : i32, i32
  }
  func.func @transform_6(%arg0: i32) -> (i32, i32) {
    %c0_i32 = arith.constant 0 : i32
    %c0_i32_0 = arith.constant 0 : i32
    %c0_i32_1 = arith.constant 0 : i32
    return %c0_i32, %c0_i32_0 : i32, i32
  }
  func.func @transform_7(%arg0: i32) -> (i32, i32) {
    %c0_i32 = arith.constant 0 : i32
    %c0_i32_0 = arith.constant 0 : i32
    %c0_i32_1 = arith.constant 0 : i32
    return %c0_i32, %c0_i32_0 : i32, i32
  }
  func.func @transform_8(%arg0: i32) -> (i32, i32) {
    %c0_i32 = arith.constant 0 : i32
    %c0_i32_0 = arith.constant 0 : i32
    %c0_i32_1 = arith.constant 0 : i32
    return %c0_i32, %c0_i32_0 : i32, i32
  }
  func.func @transform_9(%arg0: i32) -> (i32, i32) {
    %c0_i32 = arith.constant 0 : i32
    %c0_i32_0 = arith.constant 0 : i32
    return %arg0, %c0_i32 : i32, i32
  }
}

</mosaic_0001>

<llo_original>
// kernel: tpu_custom_call.1
$region0: #{tpu_custom_call.1}
  #allocation0 [shape = 'u32[]', space=smem, size = 0x4, offset = 0x4, fixed_abs, tag = 'smem constant byte address 0x4 - core index']
  #allocation1 [shape = 'u32[72,128]{1,0:T(1,128)}', space=vmem, size = 0x9000, scoped, tag = 'internal scratch']
  #allocation2 [shape = 'bf16[8,96]{1,0:T(8,128)(2,1)}', space=vmem, size = 0x800, scoped, tag = 'scratch operand']
  #allocation3 [shape = 'bf16[8,32]{1,0:T(8,128)(2,1)}', space=vmem, size = 0x800, scoped, tag = 'scratch operand']
  %s0 = inlined_call_operand.hbm [shape: f32[16,32], index: 0, kind: input, shape index: {}]
  %s1 = inlined_call_operand.hbm [shape: bf16[32,96], index: 1, kind: input, shape index: {}]
  %s2 = inlined_call_operand.vmem [shape: f32[1,96], index: 2, kind: input, shape index: {}]
  %s3 = inlined_call_operand.hbm [shape: bf16[32,32], index: 3, kind: input, shape index: {}]
  %s4 = inlined_call_operand.vmem [shape: f32[1,32], index: 4, kind: input, shape index: {}]
  %s5 = inlined_call_operand.vmem [shape: f32[1,32], index: 5, kind: input, shape index: {}]
  %s6 = inlined_call_operand.vmem [shape: f32[1,32], index: 6, kind: input, shape index: {}]
  %s7 = inlined_call_operand.hbm [shape: bf16[32,32], index: 7, kind: input, shape index: {}]
  %s8 = inlined_call_operand.vmem [shape: f32[1,32], index: 8, kind: input, shape index: {}]
  %s9 = inlined_call_operand.hbm [shape: f32[16,32], index: 9, kind: output, shape index: {}]
  %s10 = sld [smem:[#allocation0]]
  $region85: #{tpu_custom_call.1} parent=0
    _
  %s12 = ssub.s32 1, %s10
  %s13 = scalar_select 0, %s12, %s10
  $region1: #{tpu_custom_call.1} parent=0
    #allocation4 [shape = 'u8[8192]{0}', space=vmem, size = 0x2000, scoped, tag = 'input window, operand 0']
    #allocation5 [shape = 's32[2]{0}', space=sflag, size = 0x8, scoped, tag = 'scoped memory for tpu_custom_call.1']
    #allocation6 [shape = 's32[2]{0}', space=sflag, size = 0x8, scoped, tag = 'scoped memory for tpu_custom_call.1']
    #allocation7 [shape = 'u8[8192]{0}', space=vmem, size = 0x2000, scoped, tag = 'input window, operand 1, single buffered']
    #allocation8 [shape = 's32[1]{0}', space=sflag, size = 0x4, scoped, tag = 'scoped memory for tpu_custom_call.1']
    #allocation9 [shape = 'u8[8192]{0}', space=vmem, size = 0x2000, scoped, tag = 'input window, operand 3, single buffered']
    #allocation10 [shape = 'u8[8192]{0}', space=vmem, size = 0x2000, scoped, tag = 'input window, operand 7, single buffered']
    #allocation11 [shape = 's32[1]{0}', space=sflag, size = 0x4, scoped, tag = 'scoped memory for tpu_custom_call.1']
    #allocation12 [shape = 'u8[8192]{0}', space=vmem, size = 0x2000, scoped, tag = 'output window, operand 0']
    %14 = vsyncpa [#allocation5], 0
    %s15 = scalar_lea.sflag [#allocation5], 1
    %16 = vsyncpa %s15, 0
    %17 = vsyncpa [#allocation8], 0
    %18 = vsyncpa [#allocation11], 0
    %19 = vsyncpa [#allocation6], 0
    %s20 = scalar_lea.sflag [#allocation6], 1
    %21 = vsyncpa %s20, 0
    loop: start=0, step=1, limit=4
    $region2: #{tpu_custom_call.1} parent=1 // loop_pre_header
      _
    $region3: #{tpu_custom_call.1} parent=1 // loop_header
      %s23 = sphi 0, %s27
      %p24 = scmp.ge.s32.totalorder %s23, 4
      %s33 = sphi 0, %s35
      %s36 = sphi 0, %s33
      %s37 = sphi 0, %s36
      %s53 = sphi 0, %s37
      %s57 = sphi 0, %s57
      %s59 = sphi 0, %s57
      %s60 = sphi 0, %s59
      %s74 = sphi 0, %s60
      %s78 = sphi 0, %s78
      %s80 = sphi 0, %s78
      %s81 = sphi 0, %s80
      %s95 = sphi 0, %s81
      %s99 = sphi 0, %s99
      %s101 = sphi 0, %s99
      %s102 = sphi 0, %s101
      %s116 = sphi 0, %s102
      %s120 = sphi 0, %s120
      %s122 = sphi 0, %s120
      %s123 = sphi 0, %s122
      %s137 = sphi 0, %s123
      %s141 = sphi 0, %s141
      %s143 = sphi 0, %s141
      %s144 = sphi 0, %s143
      %s158 = sphi 0, %s144
      %s162 = sphi 0, %s162
      %s164 = sphi 0, %s162
      %s165 = sphi 0, %s164
      %s179 = sphi 0, %s165
      %s183 = sphi 0, %s183
      %s185 = sphi 0, %s183
      %s186 = sphi 0, %s185
      %s200 = sphi 0, %s186
      %s204 = sphi 0, %s204
      %s206 = sphi 0, %s204
      %s207 = sphi 0, %s206
      %s221 = sphi 0, %s207
      %s227 = sphi 0, %s229
      %s230 = sphi 0, %s227
      %s231 = sphi 0, %s230
      %s247 = sphi 0, %s231
    $region4: #{tpu_custom_call.1} parent=1 // loop_header_branch
      %26 = sbr.rel (%p24) target = $region8
    $region5: #{tpu_custom_call.1} parent=1 // loop_body
      %s28 = ssub.s32 %s23, 1
      %s29 = ssub.s32 %s23, 2
      %s30 = sadd.s32 %s23, 1
      %s31 = ssub.s32 %s23, %s30
      %p32 = scmp.eq.s32.totalorder %s31, 0
      %s34 = sadd.s32 %s33, 1
      %s35 = scalar_select %p32, %s33, %s34
      %p38 = pneg %p32
      %p39 = scmp.eq.s32.totalorder %s23, 1
      %p40 = por %p38, %p39
      %p41 = scmp.ne.s32.totalorder %s33, %s36
      %p42 = scmp.eq.s32.totalorder %s23, 0
      %p43 = por %p41, %p42
      %p44 = scmp.ne.s32.totalorder %s33, %s36
      %p45 = scmp.eq.s32.totalorder %s28, 1
      %p46 = por %p44, %p45
      %p47 = scmp.ne.s32.totalorder %s36, %s37
      %p48 = scmp.eq.s32.totalorder %s28, 0
      %p49 = por %p47, %p48
      %p50 = scmp.ne.s32.totalorder %s36, %s37
      %p51 = scmp.eq.s32.totalorder %s29, 1
      %p52 = por %p50, %p51
      %p54 = scmp.ne.s32.totalorder %s37, %s53
      %p55 = scmp.eq.s32.totalorder %s29, 0
      %p56 = por %p54, %p55
      %s58 = sadd.s32 %s57, 1
      %p61 = scmp.eq.s32.totalorder %s23, 1
      %p62 = scmp.ne.s32.totalorder %s57, %s59
      %p63 = scmp.eq.s32.totalorder %s23, 0
      %p64 = por %p62, %p63
      %p65 = scmp.ne.s32.totalorder %s57, %s59
      %p66 = scmp.eq.s32.totalorder %s28, 1
      %p67 = por %p65, %p66
      %p68 = scmp.ne.s32.totalorder %s59, %s60
      %p69 = scmp.eq.s32.totalorder %s28, 0
      %p70 = por %p68, %p69
      %p71 = scmp.ne.s32.totalorder %s59, %s60
      %p72 = scmp.eq.s32.totalorder %s29, 1
      %p73 = por %p71, %p72
      %p75 = scmp.ne.s32.totalorder %s60, %s74
      %p76 = scmp.eq.s32.totalorder %s29, 0
      %p77 = por %p75, %p76
      %s79 = sadd.s32 %s78, 1
      %p82 = scmp.eq.s32.totalorder %s23, 1
      %p83 = scmp.ne.s32.totalorder %s78, %s80
      %p84 = scmp.eq.s32.totalorder %s23, 0
      %p85 = por %p83, %p84
      %p86 = scmp.ne.s32.totalorder %s78, %s80
      %p87 = scmp.eq.s32.totalorder %s28, 1
      %p88 = por %p86, %p87
      %p89 = scmp.ne.s32.totalorder %s80, %s81
      %p90 = scmp.eq.s32.totalorder %s28, 0
      %p91 = por %p89, %p90
      %p92 = scmp.ne.s32.totalorder %s80, %s81
      %p93 = scmp.eq.s32.totalorder %s29, 1
      %p94 = por %p92, %p93
      %p96 = scmp.ne.s32.totalorder %s81, %s95
      %p97 = scmp.eq.s32.totalorder %s29, 0
      %p98 = por %p96, %p97
      %s100 = sadd.s32 %s99, 1
      %p103 = scmp.eq.s32.totalorder %s23, 1
      %p104 = scmp.ne.s32.totalorder %s99, %s101
      %p105 = scmp.eq.s32.totalorder %s23, 0
      %p106 = por %p104, %p105
      %p107 = scmp.ne.s32.totalorder %s99, %s101
      %p108 = scmp.eq.s32.totalorder %s28, 1
      %p109 = por %p107, %p108
      %p110 = scmp.ne.s32.totalorder %s101, %s102
      %p111 = scmp.eq.s32.totalorder %s28, 0
      %p112 = por %p110, %p111
      %p113 = scmp.ne.s32.totalorder %s101, %s102
      %p114 = scmp.eq.s32.totalorder %s29, 1
      %p115 = por %p113, %p114
      %p117 = scmp.ne.s32.totalorder %s102, %s116
      %p118 = scmp.eq.s32.totalorder %s29, 0
      %p119 = por %p117, %p118
      %s121 = sadd.s32 %s120, 1
      %p124 = scmp.eq.s32.totalorder %s23, 1
      %p125 = scmp.ne.s32.totalorder %s120, %s122
      %p126 = scmp.eq.s32.totalorder %s23, 0
      %p127 = por %p125, %p126
      %p128 = scmp.ne.s32.totalorder %s120, %s122
      %p129 = scmp.eq.s32.totalorder %s28, 1
      %p130 = por %p128, %p129
      %p131 = scmp.ne.s32.totalorder %s122, %s123
      %p132 = scmp.eq.s32.totalorder %s28, 0
      %p133 = por %p131, %p132
      %p134 = scmp.ne.s32.totalorder %s122, %s123
      %p135 = scmp.eq.s32.totalorder %s29, 1
      %p136 = por %p134, %p135
      %p138 = scmp.ne.s32.totalorder %s123, %s137
      %p139 = scmp.eq.s32.totalorder %s29, 0
      %p140 = por %p138, %p139
      %s142 = sadd.s32 %s141, 1
      %p145 = scmp.eq.s32.totalorder %s23, 1
      %p146 = scmp.ne.s32.totalorder %s141, %s143
      %p147 = scmp.eq.s32.totalorder %s23, 0
      %p148 = por %p146, %p147
      %p149 = scmp.ne.s32.totalorder %s141, %s143
      %p150 = scmp.eq.s32.totalorder %s28, 1
      %p151 = por %p149, %p150
      %p152 = scmp.ne.s32.totalorder %s143, %s144
      %p153 = scmp.eq.s32.totalorder %s28, 0
      %p154 = por %p152, %p153
      %p155 = scmp.ne.s32.totalorder %s143, %s144
      %p156 = scmp.eq.s32.totalorder %s29, 1
      %p157 = por %p155, %p156
      %p159 = scmp.ne.s32.totalorder %s144, %s158
      %p160 = scmp.eq.s32.totalorder %s29, 0
      %p161 = por %p159, %p160
      %s163 = sadd.s32 %s162, 1
      %p166 = scmp.eq.s32.totalorder %s23, 1
      %p167 = scmp.ne.s32.totalorder %s162, %s164
      %p168 = scmp.eq.s32.totalorder %s23, 0
      %p169 = por %p167, %p168
      %p170 = scmp.ne.s32.totalorder %s162, %s164
      %p171 = scmp.eq.s32.totalorder %s28, 1
      %p172 = por %p170, %p171
      %p173 = scmp.ne.s32.totalorder %s164, %s165
      %p174 = scmp.eq.s32.totalorder %s28, 0
      %p175 = por %p173, %p174
      %p176 = scmp.ne.s32.totalorder %s164, %s165
      %p177 = scmp.eq.s32.totalorder %s29, 1
      %p178 = por %p176, %p177
      %p180 = scmp.ne.s32.totalorder %s165, %s179
      %p181 = scmp.eq.s32.totalorder %s29, 0
      %p182 = por %p180, %p181
      %s184 = sadd.s32 %s183, 1
      %p187 = scmp.eq.s32.totalorder %s23, 1
      %p188 = scmp.ne.s32.totalorder %s183, %s185
      %p189 = scmp.eq.s32.totalorder %s23, 0
      %p190 = por %p188, %p189
      %p191 = scmp.ne.s32.totalorder %s183, %s185
      %p192 = scmp.eq.s32.totalorder %s28, 1
      %p193 = por %p191, %p192
      %p194 = scmp.ne.s32.totalorder %s185, %s186
      %p195 = scmp.eq.s32.totalorder %s28, 0
      %p196 = por %p194, %p195
      %p197 = scmp.ne.s32.totalorder %s185, %s186
      %p198 = scmp.eq.s32.totalorder %s29, 1
      %p199 = por %p197, %p198
      %p201 = scmp.ne.s32.totalorder %s186, %s200
      %p202 = scmp.eq.s32.totalorder %s29, 0
      %p203 = por %p201, %p202
      %s205 = sadd.s32 %s204, 1
      %p208 = scmp.eq.s32.totalorder %s23, 1
      %p209 = scmp.ne.s32.totalorder %s204, %s206
      %p210 = scmp.eq.s32.totalorder %s23, 0
      %p211 = por %p209, %p210
      %p212 = scmp.ne.s32.totalorder %s204, %s206
      %p213 = scmp.eq.s32.totalorder %s28, 1
      %p214 = por %p212, %p213
      %p215 = scmp.ne.s32.totalorder %s206, %s207
      %p216 = scmp.eq.s32.totalorder %s28, 0
      %p217 = por %p215, %p216
      %p218 = scmp.ne.s32.totalorder %s206, %s207
      %p219 = scmp.eq.s32.totalorder %s29, 1
      %p220 = por %p218, %p219
      %p222 = scmp.ne.s32.totalorder %s207, %s221
      %p223 = scmp.eq.s32.totalorder %s29, 0
      %p224 = por %p222, %p223
      %s225 = ssub.s32 %s23, %s30
      %p226 = scmp.eq.s32.totalorder %s225, 0
      %s228 = sadd.s32 %s227, 1
      %s229 = scalar_select %p226, %s227, %s228
      %p232 = pneg %p226
      %p233 = scmp.eq.s32.totalorder %s23, 1
      %p234 = por %p232, %p233
      %p235 = scmp.ne.s32.totalorder %s227, %s230
      %p236 = scmp.eq.s32.totalorder %s23, 0
      %p237 = por %p235, %p236
      %p238 = scmp.ne.s32.totalorder %s227, %s230
      %p239 = scmp.eq.s32.totalorder %s28, 1
      %p240 = por %p238, %p239
      %p241 = scmp.ne.s32.totalorder %s230, %s231
      %p242 = scmp.eq.s32.totalorder %s28, 0
      %p243 = por %p241, %p242
      %p244 = scmp.ne.s32.totalorder %s230, %s231
      %p245 = scmp.eq.s32.totalorder %s29, 1
      %p246 = por %p244, %p245
      %p248 = scmp.ne.s32.totalorder %s231, %s247
      %p249 = scmp.eq.s32.totalorder %s29, 0
      %p250 = por %p248, %p249
      %p251 = scmp.le.s32.totalorder 1, %s23
      %p252 = scmp.lt.s32.totalorder %s23, 3
      %p253 = pnand %p251, %p252
      %p254 = pneg %p253
      // Predicated region
      $region9: #{tpu_custom_call.1} parent=5 // pred_check
        _
      $region10: #{tpu_custom_call.1} parent=5 // pred_check_branch
        %256 = sbr.rel (%p253) target = $region12
      $region11: #{tpu_custom_call.1} parent=5 // pred_region
        %s257 = ssub.s32 %s23, 1
        // Predicated region
        $region13: #{tpu_custom_call.1} parent=11 // pred_check
          %p258 = pneg %p70
        $region14: #{tpu_custom_call.1} parent=11 // pred_check_branch
          %260 = sbr.rel (%p258) target = $region16
        $region15: #{tpu_custom_call.1} parent=11 // pred_region
          %262 = vsyncadd [#allocation8], 0
          %s263 = sshll.u32 %s1, 4
          %s264 = int_to_ptr.hbm [resolvable:$true] %s263
          %s265 = sshll.u32 [#allocation7], 4
          %s266 = int_to_ptr.vmem [resolvable:$true] %s265
          %271 = dma.hbm_to_vmem [thread:$0]  %s264, 256, %s266, [#allocation8], 64, 64, 4
        $region16: #{tpu_custom_call.1} parent=11 // pred_fallthru
          _
        // Predicated region
        $region17: #{tpu_custom_call.1} parent=11 // pred_check
          %p272 = pneg %p91
        $region18: #{tpu_custom_call.1} parent=11 // pred_check_branch
          %274 = sbr.rel (%p272) target = $region20
        $region19: #{tpu_custom_call.1} parent=11 // pred_region
          _
        $region20: #{tpu_custom_call.1} parent=11 // pred_fallthru
          _
        // Predicated region
        $region21: #{tpu_custom_call.1} parent=11 // pred_check
          %p275 = pneg %p112
        $region22: #{tpu_custom_call.1} parent=11 // pred_check_branch
          %277 = sbr.rel (%p275) target = $region24
        $region23: #{tpu_custom_call.1} parent=11 // pred_region
          %279 = vsyncadd [#allocation8], 0
          %s280 = sshll.u32 %s3, 4
          %s281 = int_to_ptr.hbm [resolvable:$true] %s280
          %s282 = sshll.u32 [#allocation9], 4
          %s283 = int_to_ptr.vmem [resolvable:$true] %s282
          %288 = dma.hbm_to_vmem [thread:$0]  %s281, 256, %s283, [#allocation8], 64, 64, 4
        $region24: #{tpu_custom_call.1} parent=11 // pred_fallthru
          _
        // Predicated region
        $region25: #{tpu_custom_call.1} parent=11 // pred_check
          %p289 = pneg %p133
        $region26: #{tpu_custom_call.1} parent=11 // pred_check_branch
          %291 = sbr.rel (%p289) target = $region28
        $region27: #{tpu_custom_call.1} parent=11 // pred_region
          _
        $region28: #{tpu_custom_call.1} parent=11 // pred_fallthru
          _
        // Predicated region
        $region29: #{tpu_custom_call.1} parent=11 // pred_check
          %p292 = pneg %p154
        $region30: #{tpu_custom_call.1} parent=11 // pred_check_branch
          %294 = sbr.rel (%p292) target = $region32
        $region31: #{tpu_custom_call.1} parent=11 // pred_region
          _
        $region32: #{tpu_custom_call.1} parent=11 // pred_fallthru
          _
        // Predicated region
        $region33: #{tpu_custom_call.1} parent=11 // pred_check
          %p295 = pneg %p175
        $region34: #{tpu_custom_call.1} parent=11 // pred_check_branch
          %297 = sbr.rel (%p295) target = $region36
        $region35: #{tpu_custom_call.1} parent=11 // pred_region
          _
        $region36: #{tpu_custom_call.1} parent=11 // pred_fallthru
          _
        // Predicated region
        $region37: #{tpu_custom_call.1} parent=11 // pred_check
          %p298 = pneg %p196
        $region38: #{tpu_custom_call.1} parent=11 // pred_check_branch
          %300 = sbr.rel (%p298) target = $region40
        $region39: #{tpu_custom_call.1} parent=11 // pred_region
          %302 = vsyncadd [#allocation11], 0
          %s303 = sshll.u32 %s7, 4
          %s304 = int_to_ptr.hbm [resolvable:$true] %s303
          %s305 = sshll.u32 [#allocation10], 4
          %s306 = int_to_ptr.vmem [resolvable:$true] %s305
          %311 = dma.hbm_to_vmem [thread:$0]  %s304, 256, %s306, [#allocation11], 64, 64, 4
        $region40: #{tpu_custom_call.1} parent=11 // pred_fallthru
          _
        // Predicated region
        $region41: #{tpu_custom_call.1} parent=11 // pred_check
          %p312 = pneg %p217
        $region42: #{tpu_custom_call.1} parent=11 // pred_check_branch
          %314 = sbr.rel (%p312) target = $region44
        $region43: #{tpu_custom_call.1} parent=11 // pred_region
          _
        $region44: #{tpu_custom_call.1} parent=11 // pred_fallthru
          _
      $region12: #{tpu_custom_call.1} parent=5 // pred_fallthru
        _
      %p315 = scmp.lt.s32.totalorder %s23, 2
      // Predicated region
      $region45: #{tpu_custom_call.1} parent=5 // pred_check
        %p316 = pneg %p315
      $region46: #{tpu_custom_call.1} parent=5 // pred_check_branch
        %318 = sbr.rel (%p316) target = $region48
      $region47: #{tpu_custom_call.1} parent=5 // pred_region
        // Predicated region
        $region49: #{tpu_custom_call.1} parent=47 // pred_check
          %p319 = pneg %p43
        $region50: #{tpu_custom_call.1} parent=47 // pred_check_branch
          %321 = sbr.rel (%p319) target = $region52
        $region51: #{tpu_custom_call.1} parent=47 // pred_region
          %s322 = sand.u32 %s33, 1
          %s323 = scalar_lea.sflag [#allocation5], %s322
          %s324 = sand.u32 %s33, 1
          %s325 = smul.addr %s324, 8
          %s326 = scalar_lea.vmem [#allocation4], %s325
          %328 = vsyncadd %s323, 0
          %s329 = smul.addr %s23, 8
          %s330 = scalar_lea.hbm %s0, %s329
          %s332 = sshll.u32 %s330, 4
          %s333 = int_to_ptr.hbm [resolvable:$true] %s332
          %s334 = sshll.u32 %s326, 4
          %s335 = int_to_ptr.vmem [resolvable:$true] %s334
          %337 = dma.hbm_to_vmem [thread:$0]  %s333, 128, %s335, %s323
        $region52: #{tpu_custom_call.1} parent=47 // pred_fallthru
          _
      $region48: #{tpu_custom_call.1} parent=5 // pred_fallthru
        _
      %p338 = scmp.le.s32.totalorder 1, %s23
      %p339 = scmp.lt.s32.totalorder %s23, 3
      %p340 = pnand %p338, %p339
      %p341 = pneg %p340
      // Predicated region
      $region53: #{tpu_custom_call.1} parent=5 // pred_check
        _
      $region54: #{tpu_custom_call.1} parent=5 // pred_check_branch
        %343 = sbr.rel (%p340) target = $region56
      $region55: #{tpu_custom_call.1} parent=5 // pred_region
        %s344 = ssub.s32 %s23, 1
        %s345 = sand.u32 %s36, 1
        %s346 = scalar_lea.sflag [#allocation5], %s345
        %s347 = sand.u32 %s36, 1
        %s348 = smul.addr %s347, 8
        %s349 = scalar_lea.vmem [#allocation4], %s348
        // Predicated region
        $region57: #{tpu_custom_call.1} parent=55 // pred_check
          %p350 = pneg %p49
        $region58: #{tpu_custom_call.1} parent=55 // pred_check_branch
          %352 = sbr.rel (%p350) target = $region60
        $region59: #{tpu_custom_call.1} parent=55 // pred_region
          %354 = dma.done %s346, 128
        $region60: #{tpu_custom_call.1} parent=55 // pred_fallthru
          _
        // Predicated region
        $region61: #{tpu_custom_call.1} parent=55 // pred_check
          %p355 = pneg %p70
        $region62: #{tpu_custom_call.1} parent=55 // pred_check_branch
          %357 = sbr.rel (%p355) target = $region64
        $region63: #{tpu_custom_call.1} parent=55 // pred_region
          %359 = dma.done [#allocation8], 256
        $region64: #{tpu_custom_call.1} parent=55 // pred_fallthru
          _
        // Predicated region
        $region65: #{tpu_custom_call.1} parent=55 // pred_check
          %p360 = pneg %p112
        $region66: #{tpu_custom_call.1} parent=55 // pred_check_branch
          %362 = sbr.rel (%p360) target = $region68
        $region67: #{tpu_custom_call.1} parent=55 // pred_region
          %364 = dma.done [#allocation8], 256
        $region68: #{tpu_custom_call.1} parent=55 // pred_fallthru
          _
        // Predicated region
        $region69: #{tpu_custom_call.1} parent=55 // pred_check
          %p365 = pneg %p196
        $region70: #{tpu_custom_call.1} parent=55 // pred_check_branch
          %367 = sbr.rel (%p365) target = $region72
        $region71: #{tpu_custom_call.1} parent=55 // pred_region
          %369 = dma.done [#allocation11], 256
        $region72: #{tpu_custom_call.1} parent=55 // pred_fallthru
          _
        %s370 = sand.u32 %s36, 1
        %s371 = scalar_lea.sflag [#allocation5], %s370
        %s372 = sand.u32 %s36, 1
        %s373 = smul.addr %s372, 8
        %s374 = scalar_lea.vmem [#allocation4], %s373
        %p375 = pneg %p49
        %p376 = pneg %p46
        %p377 = pneg %p70
        %p378 = pneg %p67
        %p379 = pneg %p91
        %p380 = pneg %p88
        %p381 = pneg %p112
        %p382 = pneg %p109
        %p383 = pneg %p133
        %p384 = pneg %p130
        %p385 = pneg %p154
        %p386 = pneg %p151
        %p387 = pneg %p175
        %p388 = pneg %p172
        %p389 = pneg %p196
        %p390 = pneg %p193
        %p391 = pneg %p217
        %p392 = pneg %p214
        %p393 = pneg %p243
        %p394 = pneg %p240
        %s395 = sand.u32 %s230, 1
        %s396 = scalar_lea.sflag [#allocation6], %s395
        %s397 = sand.u32 %s230, 1
        %s398 = smul.addr %s397, 8
        %s399 = scalar_lea.vmem [#allocation12], %s398
        %v401 = vld [vmem:[%s349] sm:$0xff]
        %v402 = vpack.c.bf16 %v401, %v401
        %v403 = vld [vmem:[#allocation7] sm:$0xf]
        %v404 = vld [vmem:[#allocation7 + $0x4] sm:$0xf]
        %v405 = vld [vmem:[#allocation7 + $0x8] sm:$0xf]
        %v406 = vld [vmem:[#allocation7 + $0xc] sm:$0xf]
        %v407 = vld [vmem:[%s2] sm:$0x1]
        %v409 = vperm.slane %v407, 0
        %v415 = vunpack.c.l.b16 %v403
        %v416 = vunpack.c.l.b16 %v404
        %v417 = vunpack.c.l.b16 %v405
        %v418 = vunpack.c.l.b16 %v406
        %v419 = vpack.c.b16 %v416, %v415
        %v420 = vpack.c.b16 %v418, %v417
        %vm423 = vcmask 261120
        %v425 = vsel %vm423, %v402, 0
        %427 = vmatpush.bf16.msra.mxu0 0
        %428 = vmatpush.bf16.msra.mxu0 0
        %429 = vmatpush.bf16.msra.mxu0 0
        %430 = vmatpush.bf16.msra.mxu0 0
        %431 = vmatpush.bf16.msra.mxu0 0
        %432 = vmatpush.bf16.msra.mxu0 0
        %433 = vmatpush.bf16.msra.mxu0 %v420
        %434 = vmatpush.bf16.msra.mxu0 %v419
        %435 = vmatmul.bf16.gmra.mxu0 %v425
        %v436 = vpop.f32.mrf.mxu0
        %v437 = vadd.f32 %v409, %v436
        %v438 = vpop.f32.mrf.mxu0
        %439 = vdwg.mxu0
        %v440 = vpack.c.bf16 %v437, %v437
        %vm441 = vcmask 781312
        %442 = vst.msk [vmem:[#allocation2] sm:$0xf] %vm441, %v440
        %v443 = vld [vmem:[#allocation2] sm:$0xf]
        %v445 = vunpack.c.l.b16 %v443
        %v446 = vpack.c.b16 %v445, %v445
        %447 = vrot.lane.b32.xlu0 %v446, 96
        %v448 = vpop.permute.xlu0 %447
        %vm449 = vcmask 64512
        %v451 = vsel %vm449, %v443, 0
        %v454 = vsel %vm449, %v448, 0
        %456 = vmatpush.bf16.xpose.msra.mxu0 0
        %457 = vmatpush.bf16.xpose.msra.mxu0 0
        %458 = vmatpush.bf16.xpose.msra.mxu0 0
        %459 = vmatpush.bf16.xpose.msra.mxu0 0
        %460 = vmatpush.bf16.xpose.msra.mxu0 0
        %461 = vmatpush.bf16.xpose.msra.mxu0 0
        %462 = vmatpush.bf16.xpose.msra.mxu0 0
        %463 = vmatpush.bf16.xpose.msra.mxu0 %v454
        %464 = vmatmul.bf16.gmra.mxu0 %v451
        %v465 = vpop.f32.mrf.mxu0
        %v466 = vadd.f32 0.0, %v465
        %v467 = vpop.f32.mrf.mxu0
        %468 = vdwg.mxu0
        %v469 = vsel %vm449, %v466, -inf
        %470 = vmax.xlane.f32.xlu0 %v469
        %v471 = vpop.xlane.xlu0 %470
        %v472 = vsub.f32 %v466, %v471
        %v473 = vpack.c.bf16 %v472, %v472
        %v474 = vunpack.c.l.bf16 %v473
        %v475 = vmul.f32 %v474, 1.442695
        %v476 = vpow.pop %v475
        %v477 = vpack.c.bf16 %v476, %v476
        %v478 = vunpack.c.l.bf16 %v477
        %v479 = vsel %vm449, %v478, 0.0
        %480 = vadd.xlane.f32.xlu0 %v479
        %v481 = vpop.xlane.xlu0 %480
        %482 = vrot.lane.b32.xlu0 %v446, 64
        %v483 = vpop.permute.xlu0 %482
        %v485 = vsel %vm449, %v477, 0
        %vm487 = vcmask 1043456
        %v489 = vsel %vm487, %v483, 0
        %491 = vmatpush.bf16.msra.mxu0 0
        %492 = vmatpush.bf16.msra.mxu0 0
        %493 = vmatpush.bf16.msra.mxu0 0
        %494 = vmatpush.bf16.msra.mxu0 0
        %495 = vmatpush.bf16.msra.mxu0 0
        %496 = vmatpush.bf16.msra.mxu0 0
        %497 = vmatpush.bf16.msra.mxu0 0
        %498 = vmatpush.bf16.msra.mxu0 %v489
        %499 = vmatmul.bf16.gmra.mxu0 %v485
        %v500 = vpop.f32.mrf.mxu0
        %v501 = vadd.f32 0.0, %v500
        %v502 = vpop.f32.mrf.mxu0
        %503 = vdwg.mxu0
        %v504 = vrcp.pop %v481
        %v505 = vmul.f32 %v501, %v504
        %v506 = vpack.c.bf16 %v505, %v505
        %vm507 = vcmask 60416
        %508 = vst.msk [vmem:[#allocation3] sm:$0xf] %vm507, %v506
        %v509 = vld [vmem:[#allocation2] sm:$0xf]
        %v511 = vunpack.c.l.b16 %v509
        %v512 = vpack.c.b16 %v511, %v511
        %513 = vrot.lane.b32.xlu0 %v512, 120
        %v514 = vpop.permute.xlu0 %513
        %515 = vrot.lane.b32.xlu0 %v512, 88
        %v516 = vpop.permute.xlu0 %515
        %v518 = vsel %vm449, %v514, 0
        %v521 = vsel %vm449, %v516, 0
        %523 = vmatpush.bf16.xpose.msra.mxu0 0
        %524 = vmatpush.bf16.xpose.msra.mxu0 0
        %525 = vmatpush.bf16.xpose.msra.mxu0 0
        %526 = vmatpush.bf16.xpose.msra.mxu0 0
        %527 = vmatpush.bf16.xpose.msra.mxu0 0
        %528 = vmatpush.bf16.xpose.msra.mxu0 0
        %529 = vmatpush.bf16.xpose.msra.mxu0 0
        %530 = vmatpush.bf16.xpose.msra.mxu0 %v521
        %531 = vmatmul.bf16.gmra.mxu0 %v518
        %v532 = vpop.f32.mrf.mxu0
        %v533 = vadd.f32 0.0, %v532
        %v534 = vpop.f32.mrf.mxu0
        %535 = vdwg.mxu0
        %v536 = vsel %vm449, %v533, -inf
        %537 = vmax.xlane.f32.xlu0 %v536
        %v538 = vpop.xlane.xlu0 %537
        %v539 = vsub.f32 %v533, %v538
        %v540 = vpack.c.bf16 %v539, %v539
        %v541 = vunpack.c.l.bf16 %v540
        %v542 = vmul.f32 %v541, 1.442695
        %v543 = vpow.pop %v542
        %v544 = vpack.c.bf16 %v543, %v543
        %v545 = vunpack.c.l.bf16 %v544
        %v546 = vsel %vm449, %v545, 0.0
        %547 = vadd.xlane.f32.xlu0 %v546
        %v548 = vpop.xlane.xlu0 %547
        %549 = vrot.lane.b32.xlu0 %v512, 56
        %v550 = vpop.permute.xlu0 %549
        %v552 = vsel %vm449, %v544, 0
        %v555 = vsel %vm487, %v550, 0
        %557 = vmatpush.bf16.msra.mxu0 0
        %558 = vmatpush.bf16.msra.mxu0 0
        %559 = vmatpush.bf16.msra.mxu0 0
        %560 = vmatpush.bf16.msra.mxu0 0
        %561 = vmatpush.bf16.msra.mxu0 0
        %562 = vmatpush.bf16.msra.mxu0 0
        %563 = vmatpush.bf16.msra.mxu0 0
        %564 = vmatpush.bf16.msra.mxu0 %v555
        %565 = vmatmul.bf16.gmra.mxu0 %v552
        %v566 = vpop.f32.mrf.mxu0
        %v567 = vadd.f32 0.0, %v566
        %v568 = vpop.f32.mrf.mxu0
        %569 = vdwg.mxu0
        %v570 = vrcp.pop %v548
        %v571 = vmul.f32 %v567, %v570
        %v572 = vpack.c.bf16 %v571, %v571
        %574 = vrot.lane.b32.xlu0 %v572, 8
        %v575 = vpop.permute.xlu0 %574
        %vm577 = vcmask 126016
        %578 = vst.msk [vmem:[#allocation3] sm:$0xf] %vm577, %v575
        %v579 = vld [vmem:[#allocation2] sm:$0xf]
        %v581 = vunpack.c.l.b16 %v579
        %v582 = vpack.c.b16 %v581, %v581
        %583 = vrot.lane.b32.xlu0 %v582, 112
        %v584 = vpop.permute.xlu0 %583
        %585 = vrot.lane.b32.xlu0 %v582, 80
        %v586 = vpop.permute.xlu0 %585
        %v588 = vsel %vm449, %v584, 0
        %v591 = vsel %vm449, %v586, 0
        %593 = vmatpush.bf16.xpose.msra.mxu0 0
        %594 = vmatpush.bf16.xpose.msra.mxu0 0
        %595 = vmatpush.bf16.xpose.msra.mxu0 0
        %596 = vmatpush.bf16.xpose.msra.mxu0 0
        %597 = vmatpush.bf16.xpose.msra.mxu0 0
        %598 = vmatpush.bf16.xpose.msra.mxu0 0
        %599 = vmatpush.bf16.xpose.msra.mxu0 0
        %600 = vmatpush.bf16.xpose.msra.mxu0 %v591
        %601 = vmatmul.bf16.gmra.mxu0 %v588
        %v602 = vpop.f32.mrf.mxu0
        %v603 = vadd.f32 0.0, %v602
        %v604 = vpop.f32.mrf.mxu0
        %605 = vdwg.mxu0
        %v606 = vsel %vm449, %v603, -inf
        %607 = vmax.xlane.f32.xlu0 %v606
        %v608 = vpop.xlane.xlu0 %607
        %v609 = vsub.f32 %v603, %v608
        %v610 = vpack.c.bf16 %v609, %v609
        %v611 = vunpack.c.l.bf16 %v610
        %v612 = vmul.f32 %v611, 1.442695
        %v613 = vpow.pop %v612
        %v614 = vpack.c.bf16 %v613, %v613
        %v615 = vunpack.c.l.bf16 %v614
        %v616 = vsel %vm449, %v615, 0.0
        %617 = vadd.xlane.f32.xlu0 %v616
        %v618 = vpop.xlane.xlu0 %617
        %619 = vrot.lane.b32.xlu0 %v582, 48
        %v620 = vpop.permute.xlu0 %619
        %v622 = vsel %vm449, %v614, 0
        %v625 = vsel %vm487, %v620, 0
        %627 = vmatpush.bf16.msra.mxu0 0
        %628 = vmatpush.bf16.msra.mxu0 0
        %629 = vmatpush.bf16.msra.mxu0 0
        %630 = vmatpush.bf16.msra.mxu0 0
        %631 = vmatpush.bf16.msra.mxu0 0
        %632 = vmatpush.bf16.msra.mxu0 0
        %633 = vmatpush.bf16.msra.mxu0 0
        %634 = vmatpush.bf16.msra.mxu0 %v625
        %635 = vmatmul.bf16.gmra.mxu0 %v622
        %v636 = vpop.f32.mrf.mxu0
        %v637 = vadd.f32 0.0, %v636
        %v638 = vpop.f32.mrf.mxu0
        %639 = vdwg.mxu0
        %v640 = vrcp.pop %v618
        %v641 = vmul.f32 %v637, %v640
        %v642 = vpack.c.bf16 %v641, %v641
        %644 = vrot.lane.b32.xlu0 %v642, 16
        %v645 = vpop.permute.xlu0 %644
        %vm647 = vcmask 191616
        %648 = vst.msk [vmem:[#allocation3] sm:$0xf] %vm647, %v645
        %v649 = vld [vmem:[#allocation2] sm:$0xf]
        %v651 = vunpack.c.l.b16 %v649
        %v652 = vpack.c.b16 %v651, %v651
        %653 = vrot.lane.b32.xlu0 %v652, 104
        %v654 = vpop.permute.xlu0 %653
        %655 = vrot.lane.b32.xlu0 %v652, 72
        %v656 = vpop.permute.xlu0 %655
        %v658 = vsel %vm449, %v654, 0
        %v661 = vsel %vm449, %v656, 0
        %663 = vmatpush.bf16.xpose.msra.mxu0 0
        %664 = vmatpush.bf16.xpose.msra.mxu0 0
        %665 = vmatpush.bf16.xpose.msra.mxu0 0
        %666 = vmatpush.bf16.xpose.msra.mxu0 0
        %667 = vmatpush.bf16.xpose.msra.mxu0 0
        %668 = vmatpush.bf16.xpose.msra.mxu0 0
        %669 = vmatpush.bf16.xpose.msra.mxu0 0
        %670 = vmatpush.bf16.xpose.msra.mxu0 %v661
        %671 = vmatmul.bf16.gmra.mxu0 %v658
        %v672 = vpop.f32.mrf.mxu0
        %v673 = vadd.f32 0.0, %v672
        %v674 = vpop.f32.mrf.mxu0
        %675 = vdwg.mxu0
        %v676 = vsel %vm449, %v673, -inf
        %677 = vmax.xlane.f32.xlu0 %v676
        %v678 = vpop.xlane.xlu0 %677
        %v679 = vsub.f32 %v673, %v678
        %v680 = vpack.c.bf16 %v679, %v679
        %v681 = vunpack.c.l.bf16 %v680
        %v682 = vmul.f32 %v681, 1.442695
        %v683 = vpow.pop %v682
        %v684 = vpack.c.bf16 %v683, %v683
        %v685 = vunpack.c.l.bf16 %v684
        %v686 = vsel %vm449, %v685, 0.0
        %687 = vadd.xlane.f32.xlu0 %v686
        %v688 = vpop.xlane.xlu0 %687
        %689 = vrot.lane.b32.xlu0 %v652, 40
        %v690 = vpop.permute.xlu0 %689
        %v692 = vsel %vm449, %v684, 0
        %v695 = vsel %vm487, %v690, 0
        %697 = vmatpush.bf16.msra.mxu0 0
        %698 = vmatpush.bf16.msra.mxu0 0
        %699 = vmatpush.bf16.msra.mxu0 0
        %700 = vmatpush.bf16.msra.mxu0 0
        %701 = vmatpush.bf16.msra.mxu0 0
        %702 = vmatpush.bf16.msra.mxu0 0
        %703 = vmatpush.bf16.msra.mxu0 0
        %704 = vmatpush.bf16.msra.mxu0 %v695
        %705 = vmatmul.bf16.gmra.mxu0 %v692
        %v706 = vpop.f32.mrf.mxu0
        %v707 = vadd.f32 0.0, %v706
        %v708 = vpop.f32.mrf.mxu0
        %709 = vdwg.mxu0
        %v710 = vrcp.pop %v688
        %v711 = vmul.f32 %v707, %v710
        %v712 = vpack.c.bf16 %v711, %v711
        %714 = vrot.lane.b32.xlu0 %v712, 24
        %v715 = vpop.permute.xlu0 %714
        %vm717 = vcmask 257216
        %718 = vst.msk [vmem:[#allocation3] sm:$0xf] %vm717, %v715
        %v719 = vld [vmem:[#allocation3] sm:$0xf]
        %v720 = vld [vmem:[#allocation9] sm:$0xf]
        %v721 = vld [vmem:[#allocation9 + $0x4] sm:$0xf]
        %v722 = vld [vmem:[#allocation9 + $0x8] sm:$0xf]
        %v723 = vld [vmem:[#allocation9 + $0xc] sm:$0xf]
        %v724 = vld [vmem:[%s4] sm:$0x1]
        %v726 = vperm.slane %v724, 0
        %v732 = vunpack.c.l.b16 %v720
        %v733 = vunpack.c.l.b16 %v721
        %v734 = vunpack.c.l.b16 %v722
        %v735 = vunpack.c.l.b16 %v723
        %v736 = vpack.c.b16 %v733, %v732
        %v737 = vpack.c.b16 %v735, %v734
        %v741 = vsel %vm423, %v719, 0
        %743 = vmatpush.bf16.msra.mxu0 0
        %744 = vmatpush.bf16.msra.mxu0 0
        %745 = vmatpush.bf16.msra.mxu0 0
        %746 = vmatpush.bf16.msra.mxu0 0
        %747 = vmatpush.bf16.msra.mxu0 0
        %748 = vmatpush.bf16.msra.mxu0 0
        %749 = vmatpush.bf16.msra.mxu0 %v737
        %750 = vmatpush.bf16.msra.mxu0 %v736
        %751 = vmatmul.bf16.gmra.mxu0 %v741
        %v752 = vpop.f32.mrf.mxu0
        %v753 = vadd.f32 %v726, %v752
        %v754 = vpop.f32.mrf.mxu0
        %755 = vdwg.mxu0
        %v756 = vld [vmem:[%s349] sm:$0xff]
        %v757 = vadd.f32 %v753, %v756
        %v758 = vsel %vm423, %v757, 0.0
        %759 = vadd.xlane.f32.xlu0 %v758
        %v760 = vpop.xlane.xlu0 %759
        %v761 = vrcp.pop 32.0
        %v762 = vmul.f32 32.0, %v761
        %v763 = vsub.f32 1.0, %v762
        %v764 = vmul.f32 %v761, %v763
        %v765 = vadd.f32 %v761, %v764
        %vm766 = vweird.f32 %v761
        %v767 = vsel %vm766, %v761, %v765
        %v768 = vmul.f32 %v760, %v767
        %v769 = vsub.f32 %v757, %v768
        %v770 = vmul.f32 %v769, %v769
        %v771 = vsel %vm423, %v770, 0.0
        %772 = vadd.xlane.f32.xlu0 %v771
        %v773 = vpop.xlane.xlu0 %772
        %v774 = vmul.f32 %v773, %v767
        %v775 = vadd.f32 %v774, 1e-05
        %v776 = vrsqrt.pop %v775
        %v777 = vmul.f32 %v776, %v775
        %v778 = vmul.f32 %v777, %v776
        %v779 = vmul.f32 0.5, %v778
        %v780 = vsub.f32 1.5, %v779
        %v781 = vmul.f32 %v776, %v780
        %vm782 = vweird.f32 %v775
        %vm783 = vweird.f32 %v776
        %vm784 = vmor %vm782, %vm783
        %v785 = vsel %vm784, %v776, %v781
        %v786 = vmul.f32 %v769, %v785
        %v787 = vld [vmem:[%s5] sm:$0x1]
        %v789 = vperm.slane %v787, 0
        %v791 = vmul.f32 %v786, %v789
        %v792 = vld [vmem:[%s6] sm:$0x1]
        %v794 = vperm.slane %v792, 0
        %v796 = vadd.f32 %v791, %v794
        %v797 = vpack.c.bf16 %v796, %v796
        %v798 = vld [vmem:[#allocation10] sm:$0xf]
        %v799 = vld [vmem:[#allocation10 + $0x4] sm:$0xf]
        %v800 = vld [vmem:[#allocation10 + $0x8] sm:$0xf]
        %v801 = vld [vmem:[#allocation10 + $0xc] sm:$0xf]
        %v802 = vld [vmem:[%s8] sm:$0x1]
        %v804 = vperm.slane %v802, 0
        %v810 = vunpack.c.l.b16 %v798
        %v811 = vunpack.c.l.b16 %v799
        %v812 = vunpack.c.l.b16 %v800
        %v813 = vunpack.c.l.b16 %v801
        %v814 = vpack.c.b16 %v811, %v810
        %v815 = vpack.c.b16 %v813, %v812
        %v819 = vsel %vm423, %v797, 0
        %821 = vmatpush.bf16.msra.mxu0 0
        %822 = vmatpush.bf16.msra.mxu0 0
        %823 = vmatpush.bf16.msra.mxu0 0
        %824 = vmatpush.bf16.msra.mxu0 0
        %825 = vmatpush.bf16.msra.mxu0 0
        %826 = vmatpush.bf16.msra.mxu0 0
        %827 = vmatpush.bf16.msra.mxu0 %v815
        %828 = vmatpush.bf16.msra.mxu0 %v814
        %829 = vmatmul.bf16.gmra.mxu0 %v819
        %v830 = vpop.f32.mrf.mxu0
        %v831 = vadd.f32 %v804, %v830
        %v832 = vpop.f32.mrf.mxu0
        %833 = vdwg.mxu0
        %v834 = vmax.f32 %v831, 0.0
        %835 = vst.msk [vmem:[%s399] sm:$0xff] %vm423, %v834
        %s836 = sand.u32 %s230, 1
        %s837 = scalar_lea.sflag [#allocation6], %s836
        %s838 = sand.u32 %s230, 1
        %s839 = smul.addr %s838, 8
        %s840 = scalar_lea.vmem [#allocation12], %s839
        // Predicated region
        $region73: #{tpu_custom_call.1} parent=55 // pred_check
          %p841 = pneg %p240
        $region74: #{tpu_custom_call.1} parent=55 // pred_check_branch
          %843 = sbr.rel (%p841) target = $region76
        $region75: #{tpu_custom_call.1} parent=55 // pred_region
          %845 = vsyncadd %s837, 0
          %s846 = smul.addr %s28, 8
          %s847 = scalar_lea.hbm %s9, %s846
          %s849 = sshll.u32 %s840, 4
          %s850 = int_to_ptr.vmem [resolvable:$true] %s849
          %s851 = sshll.u32 %s847, 4
          %s852 = int_to_ptr.hbm [resolvable:$true] %s851
          %854 = dma.vmem_to_hbm [thread:$0]  %s850, 128, %s852, %s837
        $region76: #{tpu_custom_call.1} parent=55 // pred_fallthru
          _
      $region56: #{tpu_custom_call.1} parent=5 // pred_fallthru
        _
      %p855 = scmp.le.s32.totalorder 2, %s23
      // Predicated region
      $region77: #{tpu_custom_call.1} parent=5 // pred_check
        %p856 = pneg %p855
      $region78: #{tpu_custom_call.1} parent=5 // pred_check_branch
        %858 = sbr.rel (%p856) target = $region80
      $region79: #{tpu_custom_call.1} parent=5 // pred_region
        %s859 = ssub.s32 %s23, 2
        // Predicated region
        $region81: #{tpu_custom_call.1} parent=79 // pred_check
          %p860 = pneg %p246
        $region82: #{tpu_custom_call.1} parent=79 // pred_check_branch
          %862 = sbr.rel (%p860) target = $region84
        $region83: #{tpu_custom_call.1} parent=79 // pred_region
          %s863 = sand.u32 %s231, 1
          %s864 = scalar_lea.sflag [#allocation6], %s863
          %s865 = sand.u32 %s231, 1
          %s866 = smul.addr %s865, 8
          %s867 = scalar_lea.vmem [#allocation12], %s866
          %869 = dma.done %s864, 128
        $region84: #{tpu_custom_call.1} parent=79 // pred_fallthru
          _
      $region80: #{tpu_custom_call.1} parent=5 // pred_fallthru
        _
    $region6: #{tpu_custom_call.1} parent=1 // loop_footer
      %s27 = sadd.s32 1, %s23
    $region7: #{tpu_custom_call.1} parent=1 // loop_footer_branch
      %22 = sbr.rel target = $region3
    $region8: #{tpu_custom_call.1} parent=1 // loop_exit
      _
    %870 = vsyncpa [#allocation5], 1
    %s871 = scalar_lea.sflag [#allocation5], 1
    %872 = vsyncpa %s871, 1
    %873 = vsyncpa [#allocation8], 1
    %874 = vsyncpa [#allocation11], 1
    %875 = vsyncpa [#allocation6], 1
    %s876 = scalar_lea.sflag [#allocation6], 1
    %877 = vsyncpa %s876, 1

</llo_original>
